<compile_context>
chip_gen: v7x
topology: tpu7x:2x2x1
jax: 0.10.0
libtpu: 0.0.40
codegen_flags: <defaults>
</compile_context>

<pallas_src>
import jax
import jax.numpy as jnp
import numpy as np
from jax.experimental import pallas as pl
from jax.experimental.pallas import tpu as pltpu


def _dma_copy_kernel(x_hbm, o_hbm, sem):
    # Forward of PointLatentVariable: return the parameter X verbatim.
    # Single HBM->HBM DMA: start + wait.  No VMEM staging, no vector ops.
    cp = pltpu.make_async_copy(x_hbm, o_hbm, sem)
    cp.start()
    cp.wait()


def point_latent_variable_forward(X, *, force_pallas_copy=False):
    """Pallas implementation of PointLatentVariable.forward() -> X.

    Default (force_pallas_copy=False): return X directly.  The op is a
    parameter read, so this zero-copy path matches the PyTorch semantics
    exactly and is the true optimum on every TPU generation.

    force_pallas_copy=True: materialize the result through a Pallas kernel
    boundary as one HBM->HBM DMA (no VMEM, no grid, no tiling decisions).
    """
    if not force_pallas_copy:
        return X

    itemsize = jnp.dtype(X.dtype).itemsize
    nbytes = int(np.prod(X.shape)) * itemsize

    return pl.pallas_call(
        _dma_copy_kernel,
        out_shape=jax.ShapeDtypeStruct(X.shape, X.dtype),
        in_specs=[pl.BlockSpec(memory_space=pl.ANY)],
        out_specs=pl.BlockSpec(memory_space=pl.ANY),
        scratch_shapes=[pltpu.SemaphoreType.DMA(())],
        cost_estimate=pl.CostEstimate(
            flops=0, transcendentals=0, bytes_accessed=2 * nbytes),
    )(X)


if __name__ == "__main__":
    fwd = jax.jit(point_latent_variable_forward,
                  static_argnames=("force_pallas_copy",))

    # Deterministic parameter init (plays the role of X_init in the module).
    n, latent_dim = 16, 8
    key = jax.random.PRNGKey(0)
    X_init = jax.random.normal(key, (n, latent_dim), dtype=jnp.float32)
    expected = np.asarray(X_init)  # host snapshot for the exactness check

    # Pallas kernel path: single HBM->HBM DMA through a kernel boundary.
    out = jax.block_until_ready(fwd(X_init, force_pallas_copy=True))
    assert out.shape == (n, latent_dim)
    assert out.dtype == X_init.dtype
    assert np.array_equal(np.asarray(out), expected)

    # Larger parameter through the same DMA path (no VMEM/tiling concerns,
    # arbitrary shapes are fine since the DMA copies the whole ref).
    n2, d2 = 1024, 256
    X2 = jax.random.normal(jax.random.PRNGKey(0), (n2, d2), dtype=jnp.float32)
    out2 = jax.block_until_ready(fwd(X2, force_pallas_copy=True))
    assert np.array_equal(np.asarray(out2), np.asarray(X2))

    # Default zero-copy fast path (the true optimum: just the parameter read).
    out3 = jax.block_until_ready(fwd(X_init))
    assert np.array_equal(np.asarray(out3), expected)

    print("KERNEL_OK")
</pallas_src>

<mosaic_0001>
module attributes {stable_mosaic.version = 11 : i64} {
  func.func @_dma_copy_kernel(%arg0: memref<16x8xf32, #tpu.memory_space<any>>, %arg1: memref<16x8xf32, #tpu.memory_space<any>>, %arg2: memref<!tpu.dma_semaphore, #tpu.memory_space<semaphore_mem>>) attributes {dimension_semantics = [], scalar_prefetch = 0 : i64, scratch_operands = 1 : i64, tpu.core_type = #tpu.core_type<tc>} {
    tpu.enqueue_dma source(%arg0 : memref<16x8xf32, #tpu.memory_space<any>>) target(%arg1 : memref<16x8xf32, #tpu.memory_space<any>>) target_semaphore(%arg2 : memref<!tpu.dma_semaphore, #tpu.memory_space<semaphore_mem>>)
    tpu.wait_dma2 semaphore(%arg2 : memref<!tpu.dma_semaphore, #tpu.memory_space<semaphore_mem>>) src(%arg0 : memref<16x8xf32, #tpu.memory_space<any>>) dst(%arg1 : memref<16x8xf32, #tpu.memory_space<any>>)
    return
  }
}

</mosaic_0001>

<llo_original>
// kernel: point_latent_variable_forward.1
$region0: #{point_latent_variable_forward.1}
  #allocation0 [shape = 'u32[]', space=smem, size = 0x4, offset = 0x4, fixed_abs, tag = 'smem constant byte address 0x4 - core index']
  #allocation1 [shape = 'u32[144,128]{1,0:T(1,128)}', space=vmem, size = 0x12000, scoped, tag = 'internal scratch']
  #allocation2 [shape = 's32[1]{0}', space=sflag, size = 0x4, scoped, tag = 'scratch operand']
  #allocation3 [shape = 's32[]', space=sflag, size = 0x4, offset = 0, fixed_abs, tag = 'sflag constant byte address 0x0 - dummy sync flag']
  %s0 = inlined_call_operand.vmem [shape: f32[16,8], index: 0, kind: input, shape index: {}]
  %s1 = inlined_call_operand.vmem [shape: f32[16,8], index: 1, kind: output, shape index: {}]
  %s2 = sld [smem:[#allocation0]]
  $region36: #{point_latent_variable_forward.1} parent=0
    _
  %s4 = ssub.s32 1, %s2
  %s5 = scalar_select 0, %s4, %s2
  %p7 = scmp.lt.u32.totalorder 16, 8
  %p8 = pneg %p7
  // Predicated region
  $region2: #{point_latent_variable_forward.1} parent=0 // pred_check
    _
  $region3: #{point_latent_variable_forward.1} parent=0 // pred_check_branch
    %10 = sbr.rel (%p7) target = $region5
  $region4: #{point_latent_variable_forward.1} parent=0 // pred_region
    %s25 = sand.u32 16, 7
    %p26 = scmp.eq.s32.totalorder %s25, 0
    // Predicated region
    $region17: #{point_latent_variable_forward.1} parent=4 // pred_check
      %p27 = pneg %p26
    $region18: #{point_latent_variable_forward.1} parent=4 // pred_check_branch
      %29 = sbr.rel (%p27) target = $region20
    $region19: #{point_latent_variable_forward.1} parent=4 // pred_region
      loop: start=0, step=1, limit=1
      $region21: #{point_latent_variable_forward.1} parent=19 // loop_pre_header
        _
      $region22: #{point_latent_variable_forward.1} parent=19 // loop_header
        %s31 = sphi 0, %s35
        %p32 = scmp.ge.s32.totalorder %s31, 1
        %s36 = sphi %s0, %s0
        %s37 = sphi %s1, %s1
      $region23: #{point_latent_variable_forward.1} parent=19 // loop_header_branch
        %34 = sbr.rel (%p32) target = $region27
      $region24: #{point_latent_variable_forward.1} parent=19 // loop_body
        %v38 = vld [vmem:[%s36] sm:$0xff]
        %39 = vst [vmem:[%s37] sm:$0xff] %v38
        %v40 = vld [vmem:[%s36 + $0x8] sm:$0xff]
        %41 = vst [vmem:[%s37 + $0x8] sm:$0xff] %v40
      $region25: #{point_latent_variable_forward.1} parent=19 // loop_footer
        %s35 = sadd.s32 1, %s31
      $region26: #{point_latent_variable_forward.1} parent=19 // loop_footer_branch
        %30 = sbr.rel target = $region22
      $region27: #{point_latent_variable_forward.1} parent=19 // loop_exit
        _
    $region20: #{point_latent_variable_forward.1} parent=4 // pred_fallthru
      _
    %p42 = pneg %p26
    // Predicated region
    $region28: #{point_latent_variable_forward.1} parent=4 // pred_check
      _
    $region29: #{point_latent_variable_forward.1} parent=4 // pred_check_branch
      %44 = sbr.rel (%p26) target = $region31
    $region30: #{point_latent_variable_forward.1} parent=4 // pred_region
      %s45 = sand.u32 16, 7
    $region31: #{point_latent_variable_forward.1} parent=4 // pred_fallthru
      _
  $region5: #{point_latent_variable_forward.1} parent=0 // pred_fallthru
    _
  // Predicated region
  $region6: #{point_latent_variable_forward.1} parent=0 // pred_check
    %p11 = pneg %p7
  $region7: #{point_latent_variable_forward.1} parent=0 // pred_check_branch
    %13 = sbr.rel (%p11) target = $region9
  $region8: #{point_latent_variable_forward.1} parent=0 // pred_region
    %s14 = sshllo.u32 0, 16
    loop: start=0, step=1, limit=1
    $region10: #{point_latent_variable_forward.1} parent=8 // loop_pre_header
      _
    $region11: #{point_latent_variable_forward.1} parent=8 // loop_header
      %s16 = sphi 0, %s20
      %p17 = scmp.ge.s32.totalorder %s16, 1
      %s21 = sphi %s0, %s0
      %s22 = sphi %s1, %s1
    $region12: #{point_latent_variable_forward.1} parent=8 // loop_header_branch
      %19 = sbr.rel (%p17) target = $region16
    $region13: #{point_latent_variable_forward.1} parent=8 // loop_body
      %v23 = vld [vmem:[%s21] sm:%s14]
      %24 = vst [vmem:[%s22] sm:%s14] %v23
    $region14: #{point_latent_variable_forward.1} parent=8 // loop_footer
      %s20 = sadd.s32 1, %s16
    $region15: #{point_latent_variable_forward.1} parent=8 // loop_footer_branch
      %15 = sbr.rel target = $region11
    $region16: #{point_latent_variable_forward.1} parent=8 // loop_exit
      _
  $region9: #{point_latent_variable_forward.1} parent=0 // pred_fallthru
    _
  // Predicated region
  $region32: #{point_latent_variable_forward.1} parent=0 // pred_check
    _
  $region33: #{point_latent_variable_forward.1} parent=0 // pred_check_branch
    %48 = sbr.rel (0) target = $region35
  $region34: #{point_latent_variable_forward.1} parent=0 // pred_region
    %49 = vsyncadd [#allocation2], 256
  $region35: #{point_latent_variable_forward.1} parent=0 // pred_fallthru
    _
  %s50 = smul.u32 16, 1
  %s51 = sshll.u32 %s50, 4
  %52 = dma.done [#allocation2], %s51
  %53 = vsyncmov [#allocation2]
  %s54 = vpop.sfrf %53
  %p55 = scmp.eq.s32.totalorder %s54, 0
  %p56 = pneg %p55
  %58 = shalt.err (%p56)

</llo_original>
